<compile_context>
chip_gen: v5e
topology: v5e:2x2
jax: 0.10.0
libtpu: 0.0.40
codegen_flags: <defaults>
</compile_context>

<pallas_src>
import functools

import jax
import jax.numpy as jnp
from jax.experimental import pallas as pl
from jax.experimental.pallas import tpu as pltpu


def _leaky_relu(x, slope=0.01):
    return jnp.where(x > 0, x, slope * x)


def critic_kernel(sa_ref,
                  ws_ref, bs_ref,
                  w1s_ref, w1a_ref, b1_ref,
                  w2_ref, b2_ref,
                  wv_ref, bv_ref,
                  o_ref, *, n_states, mxu_dtype):
    # sa_ref: [n_states + n_actions, tile_B]  (features x batch, batch on lanes)
    sa = sa_ref[...]
    s_t = sa[:n_states, :]            # [n_states,  tile_B]
    a_t = sa[n_states:, :]            # [n_actions, tile_B]

    # fc_s + leaky_relu: [u0, tile_B], f32 accumulation
    h = jnp.dot(ws_ref[...], s_t, preferred_element_type=jnp.float32) + bs_ref[...]
    h = _leaky_relu(h)

    # fc1 on cat([h, a], 1)  ==  W1s @ h + W1a @ a   (exact rewrite, no concat)
    x = (jnp.dot(w1s_ref[...], h.astype(mxu_dtype),
                 preferred_element_type=jnp.float32)
         + jnp.dot(w1a_ref[...], a_t, preferred_element_type=jnp.float32)
         + b1_ref[...])
    x = _leaky_relu(x)

    # fc2 + leaky_relu: [u2, tile_B]
    x = jnp.dot(w2_ref[...], x.astype(mxu_dtype),
                preferred_element_type=jnp.float32) + b2_ref[...]
    x = _leaky_relu(x)

    # fc_value (no activation): [1, tile_B] -> lane-dense store
    q = jnp.dot(wv_ref[...], x.astype(mxu_dtype),
                preferred_element_type=jnp.float32) + bv_ref[...]
    o_ref[...] = q.astype(o_ref.dtype)


def critic_forward(s, a, params, *, compute_dtype=jnp.bfloat16):
    """s: [B, n_states], a: [B, n_actions] -> q: [B, 1] float32."""
    B, n_states = s.shape

    # Fuse s/a into a single feature-major input: [F, B], batch on the lane axis.
    sa = jnp.concatenate([s, a], axis=1).T.astype(compute_dtype)
    feat = sa.shape[0]

    # Batch tiling: large tiles amortize the ~0.35us per-grid-step overhead.
    tile_b = 512 if B >= 512 else 128
    b_pad = pl.cdiv(B, tile_b) * tile_b
    if b_pad != B:
        sa = jnp.pad(sa, ((0, 0), (0, b_pad - B)))
    grid = (b_pad // tile_b,)

    # Weights in bf16 for the MXU; biases stay f32 (added to f32 accumulators).
    ws = params["ws"].astype(compute_dtype)
    w1s = params["w1s"].astype(compute_dtype)
    w1a = params["w1a"].astype(compute_dtype)
    w2 = params["w2"].astype(compute_dtype)
    wv = params["wv"].astype(compute_dtype)
    bs, b1, b2, bv = params["bs"], params["b1"], params["b2"], params["bv"]

    def resident(arr):  # full array, same block every step -> stays in VMEM
        return pl.BlockSpec(arr.shape, lambda i: (0, 0))

    kernel = functools.partial(critic_kernel, n_states=n_states,
                               mxu_dtype=compute_dtype)
    out = pl.pallas_call(
        kernel,
        out_shape=jax.ShapeDtypeStruct((1, b_pad), jnp.float32),
        grid_spec=pltpu.PrefetchScalarGridSpec(
            num_scalar_prefetch=0,
            grid=grid,
            in_specs=[pl.BlockSpec((feat, tile_b), lambda i: (0, i)),
                      resident(ws), resident(bs),
                      resident(w1s), resident(w1a), resident(b1),
                      resident(w2), resident(b2),
                      resident(wv), resident(bv)],
            out_specs=pl.BlockSpec((1, tile_b), lambda i: (0, i)),
        ),
        compiler_params=pltpu.CompilerParams(
            dimension_semantics=("parallel",),     # shard batch over v7x's 2 TCs
            vmem_limit_bytes=32 * 1024 * 1024,     # safe on v5e/v6e/v7x
        ),
    )(sa, ws, bs, w1s, w1a, b1, w2, b2, wv, bv)

    return out[0, :B].reshape(B, 1)


def init_params(key, n_states, n_actions, n_units=(5, 20, 10), init_w=1e-5):
    """Matches the PyTorch module: every Linear weight ~ U(-init_w, init_w)
    (as in __init__); biases keep the nn.Linear default U(+-1/sqrt(fan_in)).

    Weights are stored [out_features, in_features] (PyTorch layout); fc1's
    weight is pre-split along its input dim into (W1s | W1a).  Biases are
    stored as [out_features, 1] columns (feature-major layout).
    """
    u0, u1, u2 = n_units
    ks = jax.random.split(key, 8)

    def uni(k, shape, lim):
        return jax.random.uniform(k, shape, jnp.float32, -lim, lim)

    w1_full = uni(ks[2], (u1, u0 + n_actions), init_w)
    return {
        "ws": uni(ks[0], (u0, n_states), init_w),
        "bs": uni(ks[1], (u0, 1), 1.0 / (n_states ** 0.5)),
        "w1s": w1_full[:, :u0],
        "w1a": w1_full[:, u0:],
        "b1": uni(ks[3], (u1, 1), 1.0 / ((u0 + n_actions) ** 0.5)),
        "w2": uni(ks[4], (u2, u1), init_w),
        "b2": uni(ks[5], (u2, 1), 1.0 / (u1 ** 0.5)),
        "wv": uni(ks[6], (1, u2), init_w),
        "bv": uni(ks[7], (1, 1), 1.0 / (u2 ** 0.5)),
    }


def ref_forward(s, a, p):
    """Plain-JAX f32 reference (batch-major, matches PyTorch semantics)."""
    h = _leaky_relu(s @ p["ws"].T + p["bs"].T)
    x = _leaky_relu(h @ p["w1s"].T + a @ p["w1a"].T + p["b1"].T)
    x = _leaky_relu(x @ p["w2"].T + p["b2"].T)
    return x @ p["wv"].T + p["bv"].T


if __name__ == "__main__":
    B = 8
    n_states = 16
    n_actions = 4
    n_units = (5, 20, 10)

    key = jax.random.PRNGKey(0)
    k_s, k_a, k_p = jax.random.split(key, 3)
    s = jax.random.normal(k_s, (B, n_states), jnp.float32)
    a = jax.random.normal(k_a, (B, n_actions), jnp.float32)
    # init_w=0.05 (module default is 1e-5) so the matmul path carries
    # numerically meaningful signal for the correctness check.
    params = init_params(k_p, n_states, n_actions, n_units, init_w=0.05)

    q = critic_forward(s, a, params)
    q = jax.block_until_ready(q)

    q_ref = ref_forward(s, a, params)
    assert q.shape == (B, 1)
    # bf16 MXU operands with f32 accumulation -> loose-ish tolerance vs f32 ref.
    assert jnp.allclose(q, q_ref, atol=1e-2, rtol=2e-2), (
        float(jnp.max(jnp.abs(q - q_ref))))
    print("KERNEL_OK")
</pallas_src>

<mosaic_0001>
module attributes {stable_mosaic.version = 11 : i64} {
  func.func @critic_kernel(%arg0: i32, %arg1: memref<20x128xbf16, #tpu.memory_space<vmem>>, %arg2: memref<5x16xbf16, #tpu.memory_space<vmem>>, %arg3: memref<5x1xf32, #tpu.memory_space<vmem>>, %arg4: memref<20x5xbf16, #tpu.memory_space<vmem>>, %arg5: memref<20x4xbf16, #tpu.memory_space<vmem>>, %arg6: memref<20x1xf32, #tpu.memory_space<vmem>>, %arg7: memref<10x20xbf16, #tpu.memory_space<vmem>>, %arg8: memref<10x1xf32, #tpu.memory_space<vmem>>, %arg9: memref<1x10xbf16, #tpu.memory_space<vmem>>, %arg10: memref<1x1xf32, #tpu.memory_space<vmem>>, %arg11: memref<1x128xf32, #tpu.memory_space<vmem>>) attributes {dimension_semantics = [#tpu.dimension_semantics<parallel>], iteration_bounds = array<i64: 1>, scalar_prefetch = 0 : i64, scratch_operands = 0 : i64, tpu.core_type = #tpu.core_type<tc>, window_params = [{transform_indices = @transform_0, window_bounds = array<i64: 20, 128>}, {pipeline_mode = #tpu.pipeline_mode<synchronous>, transform_indices = @transform_1, window_bounds = array<i64: 5, 16>}, {pipeline_mode = #tpu.pipeline_mode<synchronous>, transform_indices = @transform_2, window_bounds = array<i64: 5, 1>}, {pipeline_mode = #tpu.pipeline_mode<synchronous>, transform_indices = @transform_3, window_bounds = array<i64: 20, 5>}, {pipeline_mode = #tpu.pipeline_mode<synchronous>, transform_indices = @transform_4, window_bounds = array<i64: 20, 4>}, {pipeline_mode = #tpu.pipeline_mode<synchronous>, transform_indices = @transform_5, window_bounds = array<i64: 20, 1>}, {pipeline_mode = #tpu.pipeline_mode<synchronous>, transform_indices = @transform_6, window_bounds = array<i64: 10, 20>}, {pipeline_mode = #tpu.pipeline_mode<synchronous>, transform_indices = @transform_7, window_bounds = array<i64: 10, 1>}, {pipeline_mode = #tpu.pipeline_mode<synchronous>, transform_indices = @transform_8, window_bounds = array<i64: 1, 10>}, {pipeline_mode = #tpu.pipeline_mode<synchronous>, transform_indices = @transform_9, window_bounds = array<i64: 1, 1>}, {transform_indices = @transform_10, window_bounds = array<i64: 1, 128>}]} {
    %c0 = arith.constant 0 : index
    %c0_0 = arith.constant 0 : index
    %0 = vector.load %arg1[%c0, %c0_0] : memref<20x128xbf16, #tpu.memory_space<vmem>>, vector<20x128xbf16>
    %1 = vector.extract_strided_slice %0 {offsets = [0, 0], sizes = [16, 128], strides = [1, 1]} : vector<20x128xbf16> to vector<16x128xbf16>
    %2 = vector.extract_strided_slice %0 {offsets = [16, 0], sizes = [4, 128], strides = [1, 1]} : vector<20x128xbf16> to vector<4x128xbf16>
    %c0_1 = arith.constant 0 : index
    %c0_2 = arith.constant 0 : index
    %3 = vector.load %arg2[%c0_1, %c0_2] : memref<5x16xbf16, #tpu.memory_space<vmem>>, vector<5x16xbf16>
    %cst = arith.constant dense<0.000000e+00> : vector<5x128xf32>
    %4 = tpu.matmul %3, %1, %cst {dimension_numbers = #tpu.dot_dimension_numbers<[1], [0], [0], [1], [0, 0, 1, 1], [], []>} : vector<5x16xbf16>, vector<16x128xbf16>, vector<5x128xf32> -> vector<5x128xf32>
    %c0_3 = arith.constant 0 : index
    %c0_4 = arith.constant 0 : index
    %5 = vector.load %arg3[%c0_3, %c0_4] : memref<5x1xf32, #tpu.memory_space<vmem>>, vector<5x1xf32>
    %6 = vector.broadcast %5 : vector<5x1xf32> to vector<5x128xf32>
    %7 = arith.addf %4, %6 : vector<5x128xf32>
    %cst_5 = arith.constant 0.000000e+00 : f32
    %8 = vector.broadcast %cst_5 : f32 to vector<5x128xf32>
    %9 = arith.cmpf ogt, %7, %8 : vector<5x128xf32>
    %cst_6 = arith.constant 0.00999999977 : f32
    %10 = vector.broadcast %cst_6 : f32 to vector<5x128xf32>
    %11 = arith.mulf %10, %7 : vector<5x128xf32>
    %12 = arith.select %9, %7, %11 : vector<5x128xi1>, vector<5x128xf32>
    %c0_7 = arith.constant 0 : index
    %c0_8 = arith.constant 0 : index
    %13 = vector.load %arg4[%c0_7, %c0_8] : memref<20x5xbf16, #tpu.memory_space<vmem>>, vector<20x5xbf16>
    %14 = arith.truncf %12 : vector<5x128xf32> to vector<5x128xbf16>
    %cst_9 = arith.constant dense<0.000000e+00> : vector<20x128xf32>
    %15 = tpu.matmul %13, %14, %cst_9 {dimension_numbers = #tpu.dot_dimension_numbers<[1], [0], [0], [1], [0, 0, 1, 1], [], []>} : vector<20x5xbf16>, vector<5x128xbf16>, vector<20x128xf32> -> vector<20x128xf32>
    %c0_10 = arith.constant 0 : index
    %c0_11 = arith.constant 0 : index
    %16 = vector.load %arg5[%c0_10, %c0_11] : memref<20x4xbf16, #tpu.memory_space<vmem>>, vector<20x4xbf16>
    %cst_12 = arith.constant dense<0.000000e+00> : vector<20x128xf32>
    %17 = tpu.matmul %16, %2, %cst_12 {dimension_numbers = #tpu.dot_dimension_numbers<[1], [0], [0], [1], [0, 0, 1, 1], [], []>} : vector<20x4xbf16>, vector<4x128xbf16>, vector<20x128xf32> -> vector<20x128xf32>
    %18 = arith.addf %15, %17 : vector<20x128xf32>
    %c0_13 = arith.constant 0 : index
    %c0_14 = arith.constant 0 : index
    %19 = vector.load %arg6[%c0_13, %c0_14] : memref<20x1xf32, #tpu.memory_space<vmem>>, vector<20x1xf32>
    %20 = vector.broadcast %19 : vector<20x1xf32> to vector<20x128xf32>
    %21 = arith.addf %18, %20 : vector<20x128xf32>
    %cst_15 = arith.constant 0.000000e+00 : f32
    %22 = vector.broadcast %cst_15 : f32 to vector<20x128xf32>
    %23 = arith.cmpf ogt, %21, %22 : vector<20x128xf32>
    %cst_16 = arith.constant 0.00999999977 : f32
    %24 = vector.broadcast %cst_16 : f32 to vector<20x128xf32>
    %25 = arith.mulf %24, %21 : vector<20x128xf32>
    %26 = arith.select %23, %21, %25 : vector<20x128xi1>, vector<20x128xf32>
    %c0_17 = arith.constant 0 : index
    %c0_18 = arith.constant 0 : index
    %27 = vector.load %arg7[%c0_17, %c0_18] : memref<10x20xbf16, #tpu.memory_space<vmem>>, vector<10x20xbf16>
    %28 = arith.truncf %26 : vector<20x128xf32> to vector<20x128xbf16>
    %cst_19 = arith.constant dense<0.000000e+00> : vector<10x128xf32>
    %29 = tpu.matmul %27, %28, %cst_19 {dimension_numbers = #tpu.dot_dimension_numbers<[1], [0], [0], [1], [0, 0, 1, 1], [], []>} : vector<10x20xbf16>, vector<20x128xbf16>, vector<10x128xf32> -> vector<10x128xf32>
    %c0_20 = arith.constant 0 : index
    %c0_21 = arith.constant 0 : index
    %30 = vector.load %arg8[%c0_20, %c0_21] : memref<10x1xf32, #tpu.memory_space<vmem>>, vector<10x1xf32>
    %31 = vector.broadcast %30 : vector<10x1xf32> to vector<10x128xf32>
    %32 = arith.addf %29, %31 : vector<10x128xf32>
    %cst_22 = arith.constant 0.000000e+00 : f32
    %33 = vector.broadcast %cst_22 : f32 to vector<10x128xf32>
    %34 = arith.cmpf ogt, %32, %33 : vector<10x128xf32>
    %cst_23 = arith.constant 0.00999999977 : f32
    %35 = vector.broadcast %cst_23 : f32 to vector<10x128xf32>
    %36 = arith.mulf %35, %32 : vector<10x128xf32>
    %37 = arith.select %34, %32, %36 : vector<10x128xi1>, vector<10x128xf32>
    %c0_24 = arith.constant 0 : index
    %c0_25 = arith.constant 0 : index
    %38 = vector.load %arg9[%c0_24, %c0_25] : memref<1x10xbf16, #tpu.memory_space<vmem>>, vector<1x10xbf16>
    %39 = arith.truncf %37 : vector<10x128xf32> to vector<10x128xbf16>
    %cst_26 = arith.constant dense<0.000000e+00> : vector<1x128xf32>
    %40 = tpu.matmul %38, %39, %cst_26 {dimension_numbers = #tpu.dot_dimension_numbers<[1], [0], [0], [1], [0, 0, 1, 1], [], []>} : vector<1x10xbf16>, vector<10x128xbf16>, vector<1x128xf32> -> vector<1x128xf32>
    %c0_27 = arith.constant 0 : index
    %c0_28 = arith.constant 0 : index
    %41 = vector.load %arg10[%c0_27, %c0_28] : memref<1x1xf32, #tpu.memory_space<vmem>>, vector<1x1xf32>
    %42 = vector.broadcast %41 : vector<1x1xf32> to vector<1x128xf32>
    %43 = arith.addf %40, %42 : vector<1x128xf32>
    %c0_29 = arith.constant 0 : index
    %c0_30 = arith.constant 0 : index
    %44 = vector.load %arg11[%c0_29, %c0_30] : memref<1x128xf32, #tpu.memory_space<vmem>>, vector<1x128xf32>
    tpu.vector_store %arg11[%c0_29, %c0_30], %43 {strides = array<i32>} : memref<1x128xf32, #tpu.memory_space<vmem>>, vector<1x128xf32>,
    return
  }
  func.func @transform_0(%arg0: i32) -> (i32, i32) {
    %c0_i32 = arith.constant 0 : i32
    %c0_i32_0 = arith.constant 0 : i32
    return %c0_i32, %arg0 : i32, i32
  }
  func.func @transform_1(%arg0: i32) -> (i32, i32) {
    %c0_i32 = arith.constant 0 : i32
    %c0_i32_0 = arith.constant 0 : i32
    %c0_i32_1 = arith.constant 0 : i32
    return %c0_i32, %c0_i32_0 : i32, i32
  }
  func.func @transform_2(%arg0: i32) -> (i32, i32) {
    %c0_i32 = arith.constant 0 : i32
    %c0_i32_0 = arith.constant 0 : i32
    %c0_i32_1 = arith.constant 0 : i32
    return %c0_i32, %c0_i32_0 : i32, i32
  }
  func.func @transform_3(%arg0: i32) -> (i32, i32) {
    %c0_i32 = arith.constant 0 : i32
    %c0_i32_0 = arith.constant 0 : i32
    %c0_i32_1 = arith.constant 0 : i32
    return %c0_i32, %c0_i32_0 : i32, i32
  }
  func.func @transform_4(%arg0: i32) -> (i32, i32) {
    %c0_i32 = arith.constant 0 : i32
    %c0_i32_0 = arith.constant 0 : i32
    %c0_i32_1 = arith.constant 0 : i32
    return %c0_i32, %c0_i32_0 : i32, i32
  }
  func.func @transform_5(%arg0: i32) -> (i32, i32) {
    %c0_i32 = arith.constant 0 : i32
    %c0_i32_0 = arith.constant 0 : i32
    %c0_i32_1 = arith.constant 0 : i32
    return %c0_i32, %c0_i32_0 : i32, i32
  }
  func.func @transform_6(%arg0: i32) -> (i32, i32) {
    %c0_i32 = arith.constant 0 : i32
    %c0_i32_0 = arith.constant 0 : i32
    %c0_i32_1 = arith.constant 0 : i32
    return %c0_i32, %c0_i32_0 : i32, i32
  }
  func.func @transform_7(%arg0: i32) -> (i32, i32) {
    %c0_i32 = arith.constant 0 : i32
    %c0_i32_0 = arith.constant 0 : i32
    %c0_i32_1 = arith.constant 0 : i32
    return %c0_i32, %c0_i32_0 : i32, i32
  }
  func.func @transform_8(%arg0: i32) -> (i32, i32) {
    %c0_i32 = arith.constant 0 : i32
    %c0_i32_0 = arith.constant 0 : i32
    %c0_i32_1 = arith.constant 0 : i32
    return %c0_i32, %c0_i32_0 : i32, i32
  }
  func.func @transform_9(%arg0: i32) -> (i32, i32) {
    %c0_i32 = arith.constant 0 : i32
    %c0_i32_0 = arith.constant 0 : i32
    %c0_i32_1 = arith.constant 0 : i32
    return %c0_i32, %c0_i32_0 : i32, i32
  }
  func.func @transform_10(%arg0: i32) -> (i32, i32) {
    %c0_i32 = arith.constant 0 : i32
    %c0_i32_0 = arith.constant 0 : i32
    return %c0_i32, %arg0 : i32, i32
  }
}

</mosaic_0001>

<llo_original>
// kernel: tpu_custom_call.1
$region0: #{tpu_custom_call.1}
  #allocation0 [shape = 'u32[]', space=smem, size = 0x4, offset = 0x4, fixed_abs, tag = 'smem constant byte address 0x4 - core index']
  #allocation1 [shape = 'u32[72,128]{1,0:T(1,128)}', space=vmem, size = 0x9000, scoped, tag = 'internal scratch']
  #allocation2 [shape = 'f32[1,1]{1,0:T(1,128)S(1)}', space=vmem, size = 0x200, scoped, tag = 'scoped memory for tpu_custom_call.1']
  %s0 = inlined_call_operand.vmem [shape: bf16[20,128], index: 0, kind: input, shape index: {}]
  %s1 = inlined_call_operand.vmem [shape: bf16[5,16], index: 1, kind: input, shape index: {}]
  %s2 = inlined_call_operand.vmem [shape: f32[5,1], index: 2, kind: input, shape index: {}]
  %s3 = inlined_call_operand.vmem [shape: bf16[20,5], index: 3, kind: input, shape index: {}]
  %s4 = inlined_call_operand.vmem [shape: bf16[20,4], index: 4, kind: input, shape index: {}]
  %s5 = inlined_call_operand.vmem [shape: f32[20,1], index: 5, kind: input, shape index: {}]
  %s6 = inlined_call_operand.vmem [shape: bf16[10,20], index: 6, kind: input, shape index: {}]
  %s7 = inlined_call_operand.vmem [shape: f32[10,1], index: 7, kind: input, shape index: {}]
  %s8 = inlined_call_operand.vmem [shape: bf16[1,10], index: 8, kind: input, shape index: {}]
  %s9 = inlined_call_operand.<no memory space> [shape: f32[1,1], index: 9, kind: input, shape index: {}]
  %s10 = inlined_call_operand.hbm [shape: f32[1,128], index: 10, kind: output, shape index: {}]
  %s11 = sld [smem:[#allocation0]]
  $region50: #{tpu_custom_call.1} parent=0
    _
  %s13 = ssub.s32 1, %s11
  %s14 = scalar_select 0, %s13, %s11
  %v15 = vstv %s9
  %16 = vst [vmem:[#allocation2] sm:$0x1] %v15
  $region1: #{tpu_custom_call.1} parent=0
    #allocation3 [shape = 'u8[512]{0}', space=vmem, size = 0x400, scoped, tag = 'output window, operand 0, single buffered']
    #allocation4 [shape = 's32[1]{0}', space=sflag, size = 0x4, scoped, tag = 'scoped memory for tpu_custom_call.1']
    %17 = vsyncpa [#allocation4], 0
    // Predicated region
    $region2: #{tpu_custom_call.1} parent=1 // pred_check
      _
    $region3: #{tpu_custom_call.1} parent=1 // pred_check_branch
      %19 = sbr.rel (0) target = $region5
    $region4: #{tpu_custom_call.1} parent=1 // pred_region
      _
    $region5: #{tpu_custom_call.1} parent=1 // pred_fallthru
      _
    // Predicated region
    $region6: #{tpu_custom_call.1} parent=1 // pred_check
      _
    $region7: #{tpu_custom_call.1} parent=1 // pred_check_branch
      %21 = sbr.rel (0) target = $region9
    $region8: #{tpu_custom_call.1} parent=1 // pred_region
      _
    $region9: #{tpu_custom_call.1} parent=1 // pred_fallthru
      _
    // Predicated region
    $region10: #{tpu_custom_call.1} parent=1 // pred_check
      _
    $region11: #{tpu_custom_call.1} parent=1 // pred_check_branch
      %23 = sbr.rel (0) target = $region13
    $region12: #{tpu_custom_call.1} parent=1 // pred_region
      _
    $region13: #{tpu_custom_call.1} parent=1 // pred_fallthru
      _
    // Predicated region
    $region14: #{tpu_custom_call.1} parent=1 // pred_check
      _
    $region15: #{tpu_custom_call.1} parent=1 // pred_check_branch
      %25 = sbr.rel (0) target = $region17
    $region16: #{tpu_custom_call.1} parent=1 // pred_region
      _
    $region17: #{tpu_custom_call.1} parent=1 // pred_fallthru
      _
    // Predicated region
    $region18: #{tpu_custom_call.1} parent=1 // pred_check
      _
    $region19: #{tpu_custom_call.1} parent=1 // pred_check_branch
      %27 = sbr.rel (0) target = $region21
    $region20: #{tpu_custom_call.1} parent=1 // pred_region
      _
    $region21: #{tpu_custom_call.1} parent=1 // pred_fallthru
      _
    // Predicated region
    $region22: #{tpu_custom_call.1} parent=1 // pred_check
      _
    $region23: #{tpu_custom_call.1} parent=1 // pred_check_branch
      %29 = sbr.rel (0) target = $region25
    $region24: #{tpu_custom_call.1} parent=1 // pred_region
      _
    $region25: #{tpu_custom_call.1} parent=1 // pred_fallthru
      _
    // Predicated region
    $region26: #{tpu_custom_call.1} parent=1 // pred_check
      _
    $region27: #{tpu_custom_call.1} parent=1 // pred_check_branch
      %31 = sbr.rel (0) target = $region29
    $region28: #{tpu_custom_call.1} parent=1 // pred_region
      _
    $region29: #{tpu_custom_call.1} parent=1 // pred_fallthru
      _
    // Predicated region
    $region30: #{tpu_custom_call.1} parent=1 // pred_check
      _
    $region31: #{tpu_custom_call.1} parent=1 // pred_check_branch
      %33 = sbr.rel (0) target = $region33
    $region32: #{tpu_custom_call.1} parent=1 // pred_region
      _
    $region33: #{tpu_custom_call.1} parent=1 // pred_fallthru
      _
    // Predicated region
    $region34: #{tpu_custom_call.1} parent=1 // pred_check
      _
    $region35: #{tpu_custom_call.1} parent=1 // pred_check_branch
      %35 = sbr.rel (0) target = $region37
    $region36: #{tpu_custom_call.1} parent=1 // pred_region
      _
    $region37: #{tpu_custom_call.1} parent=1 // pred_fallthru
      _
    // Predicated region
    $region38: #{tpu_custom_call.1} parent=1 // pred_check
      _
    $region39: #{tpu_custom_call.1} parent=1 // pred_check_branch
      %37 = sbr.rel (0) target = $region41
    $region40: #{tpu_custom_call.1} parent=1 // pred_region
      _
    $region41: #{tpu_custom_call.1} parent=1 // pred_fallthru
      _
    %v39 = vld [vmem:[%s0] sm:$0xf]
    %v40 = vld [vmem:[%s0 + $0x4] sm:$0xf]
    %v41 = vld [vmem:[%s0 + $0x8] sm:$0x3]
    %v42 = vld [vmem:[%s1] sm:$0x7]
    %v43 = vld [vmem:[%s2] sm:$0x1f]
    %45 = vset.pattern.permute.xlu0 0
    %46 = vperm.xlu0 %45, %v43
    %v47 = vpop.permute.xlu0 %46
    %v51 = vunpack.c.l.b16 %v39
    %v52 = vunpack.c.l.b16 %v40
    %v53 = vpack.c.b16 %v52, %v51
    %vm55 = vcmask 130048
    %v57 = vsel %vm55, %v42, 0
    %59 = vmatpush.bf16.msra.mxu0 0
    %60 = vmatpush.bf16.msra.mxu0 0
    %61 = vmatpush.bf16.msra.mxu0 0
    %62 = vmatpush.bf16.msra.mxu0 0
    %63 = vmatpush.bf16.msra.mxu0 0
    %64 = vmatpush.bf16.msra.mxu0 0
    %65 = vmatpush.bf16.msra.mxu0 0
    %66 = vmatpush.bf16.msra.mxu0 %v53
    %67 = vmatmul.bf16.gmra.mxu0 %v57
    %v68 = vpop.f32.mrf.mxu0
    %v69 = vadd.f32 %v47, %v68
    %v70 = vpop.f32.mrf.mxu0
    %71 = vdwg.mxu0
    %vm72 = vcmp.gt.f32.partialorder %v69, 0.0
    %v73 = vmul.f32 %v69, 0.01
    %v74 = vsel %vm72, %v69, %v73
    %v75 = vld [vmem:[%s3] sm:$0xf]
    %v76 = vld [vmem:[%s3 + $0x4] sm:$0xf]
    %v77 = vld [vmem:[%s3 + $0x8] sm:$0x3]
    %v78 = vpack.c.bf16 %v74, %v74
    %v79 = vld [vmem:[%s4] sm:$0xf]
    %v80 = vld [vmem:[%s4 + $0x4] sm:$0xf]
    %v81 = vld [vmem:[%s4 + $0x8] sm:$0x3]
    %v85 = vunpack.c.l.b16 %v79
    %v86 = vunpack.c.l.b16 %v80
    %v87 = vunpack.c.l.b16 %v81
    %v88 = vpack.c.b16 %v86, %v85
    %v89 = vpack.c.b16 %v87, %v87
    %vm90 = vcmask 31744
    %v92 = vsel %vm90, %v88, 0
    %v95 = vsel %vm90, %v89, 0
    %vm97 = vcmask 1041408
    %v99 = vsel %vm97, %v41, 0
    %101 = vmatpush.bf16.msra.mxu0 0
    %102 = vmatpush.bf16.msra.mxu0 0
    %103 = vmatpush.bf16.msra.mxu0 0
    %104 = vmatpush.bf16.msra.mxu0 0
    %105 = vmatpush.bf16.msra.mxu0 0
    %106 = vmatpush.bf16.msra.mxu0 0
    %107 = vmatpush.bf16.msra.mxu0 0
    %108 = vmatpush.bf16.msra.mxu0 %v99
    %109 = vmatmul.bf16.gmra.mxu0 %v92
    %v110 = vpop.f32.mrf.mxu0
    %v111 = vadd.f32 0.0, %v110
    %v112 = vpop.f32.mrf.mxu0
    %v113 = vadd.f32 0.0, %v112
    %114 = vmatmul.bf16.gmra.mxu0 %v95
    %v115 = vpop.f32.mrf.mxu0
    %v116 = vadd.f32 0.0, %v115
    %v117 = vpop.f32.mrf.mxu0
    %118 = vdwg.mxu0
    %v122 = vunpack.c.l.b16 %v75
    %v123 = vunpack.c.l.b16 %v76
    %v124 = vunpack.c.l.b16 %v77
    %v125 = vpack.c.b16 %v123, %v122
    %v126 = vpack.c.b16 %v124, %v124
    %vm127 = vcmask 39936
    %v129 = vsel %vm127, %v125, 0
    %v132 = vsel %vm127, %v126, 0
    %vm134 = vcmask 1042432
    %v135 = vsel %vm97, 4294967295, 65535
    %v136 = vsel %vm134, %v135, 0
    %v138 = vand.u32 %v78, %v136
    %140 = vmatpush.bf16.msra.mxu0 0
    %141 = vmatpush.bf16.msra.mxu0 0
    %142 = vmatpush.bf16.msra.mxu0 0
    %143 = vmatpush.bf16.msra.mxu0 0
    %144 = vmatpush.bf16.msra.mxu0 0
    %145 = vmatpush.bf16.msra.mxu0 0
    %146 = vmatpush.bf16.msra.mxu0 0
    %147 = vmatpush.bf16.msra.mxu0 %v138
    %148 = vmatmul.bf16.gmra.mxu0 %v129
    %v149 = vpop.f32.mrf.mxu0
    %v150 = vadd.f32 %v111, %v149
    %v151 = vpop.f32.mrf.mxu0
    %v152 = vadd.f32 %v113, %v151
    %153 = vmatmul.bf16.gmra.mxu0 %v132
    %v154 = vpop.f32.mrf.mxu0
    %v155 = vadd.f32 %v116, %v154
    %v156 = vpop.f32.mrf.mxu0
    %157 = vdwg.mxu0
    %v158 = vld [vmem:[%s5] sm:$0xff]
    %v159 = vld [vmem:[%s5 + $0x8] sm:$0xff]
    %v160 = vld [vmem:[%s5 + $0x10] sm:$0xf]
    %162 = vset.pattern.permute.xlu0 0
    %163 = vperm.xlu0 %162, %v158
    %v164 = vpop.permute.xlu0 %163
    %167 = vset.pattern.permute.xlu0 0
    %168 = vperm.xlu0 %167, %v159
    %v169 = vpop.permute.xlu0 %168
    %172 = vset.pattern.permute.xlu0 0
    %173 = vperm.xlu0 %172, %v160
    %v174 = vpop.permute.xlu0 %173
    %v176 = vadd.f32 %v150, %v164
    %v177 = vadd.f32 %v152, %v169
    %v178 = vadd.f32 %v155, %v174
    %vm179 = vcmp.gt.f32.partialorder %v176, 0.0
    %vm180 = vcmp.gt.f32.partialorder %v177, 0.0
    %vm181 = vcmp.gt.f32.partialorder %v178, 0.0
    %v182 = vmul.f32 %v176, 0.01
    %v183 = vmul.f32 %v177, 0.01
    %v184 = vmul.f32 %v178, 0.01
    %v185 = vsel %vm179, %v176, %v182
    %v186 = vsel %vm180, %v177, %v183
    %v187 = vsel %vm181, %v178, %v184
    %v188 = vld [vmem:[%s6] sm:$0xf]
    %v189 = vld [vmem:[%s6 + $0x4] sm:$0x1]
    %v190 = vpack.c.bf16 %v186, %v185
    %v191 = vpack.c.bf16 %v187, %v187
    %v192 = vld [vmem:[%s7] sm:$0xff]
    %v193 = vld [vmem:[%s7 + $0x8] sm:$0x3]
    %195 = vset.pattern.permute.xlu0 0
    %196 = vperm.xlu0 %195, %v192
    %v197 = vpop.permute.xlu0 %196
    %200 = vset.pattern.permute.xlu0 0
    %201 = vperm.xlu0 %200, %v193
    %v202 = vpop.permute.xlu0 %201
    %v206 = vunpack.c.l.b16 %v188
    %v207 = vunpack.c.l.b16 %v189
    %v208 = vpack.c.b16 %v207, %v206
    %vm209 = vcmask 162816
    %v211 = vsel %vm209, %v208, 0
    %v214 = vsel %vm97, %v191, 0
    %216 = vmatpush.bf16.msra.mxu0 0
    %217 = vmatpush.bf16.msra.mxu0 0
    %218 = vmatpush.bf16.msra.mxu0 0
    %219 = vmatpush.bf16.msra.mxu0 0
    %220 = vmatpush.bf16.msra.mxu0 0
    %221 = vmatpush.bf16.msra.mxu0 0
    %222 = vmatpush.bf16.msra.mxu0 %v214
    %223 = vmatpush.bf16.msra.mxu0 %v190
    %224 = vmatmul.bf16.gmra.mxu0 %v211
    %v225 = vpop.f32.mrf.mxu0
    %v226 = vadd.f32 %v197, %v225
    %v227 = vpop.f32.mrf.mxu0
    %v228 = vadd.f32 %v202, %v227
    %229 = vdwg.mxu0
    %vm230 = vcmp.gt.f32.partialorder %v226, 0.0
    %vm231 = vcmp.gt.f32.partialorder %v228, 0.0
    %v232 = vmul.f32 %v226, 0.01
    %v233 = vmul.f32 %v228, 0.01
    %v234 = vsel %vm230, %v226, %v232
    %v235 = vsel %vm231, %v228, %v233
    %v236 = vld [vmem:[%s8] sm:$0x1]
    %v237 = vpack.c.bf16 %v235, %v234
    %v238 = vld [vmem:[#allocation2] sm:$0x1]
    %240 = vset.pattern.permute.xlu0 0
    %241 = vperm.xlu0 %240, %v238
    %v242 = vpop.permute.xlu0 %241
    %v244 = vperm.slane %v242, 0
    %vm245 = vcmask 80896
    %v247 = vsel %vm245, %v236, 0
    %vm249 = vcmask 1044480
    %v251 = vsel %vm249, %v237, 0
    %253 = vmatpush.bf16.msra.mxu0 0
    %254 = vmatpush.bf16.msra.mxu0 0
    %255 = vmatpush.bf16.msra.mxu0 0
    %256 = vmatpush.bf16.msra.mxu0 0
    %257 = vmatpush.bf16.msra.mxu0 0
    %258 = vmatpush.bf16.msra.mxu0 0
    %259 = vmatpush.bf16.msra.mxu0 0
    %260 = vmatpush.bf16.msra.mxu0 %v251
    %261 = vmatmul.bf16.gmra.mxu0 %v247
    %v262 = vpop.f32.mrf.mxu0
    %v263 = vadd.f32 %v244, %v262
    %v264 = vpop.f32.mrf.mxu0
    %265 = vdwg.mxu0
    %266 = vst [vmem:[#allocation3] sm:$0x1] %v263
    // Predicated region
    $region42: #{tpu_custom_call.1} parent=1 // pred_check
      _
    $region43: #{tpu_custom_call.1} parent=1 // pred_check_branch
      %268 = sbr.rel (0) target = $region45
    $region44: #{tpu_custom_call.1} parent=1 // pred_region
      %270 = vsyncadd [#allocation4], 0
      %s272 = sshll.u32 [#allocation3], 4
      %s273 = int_to_ptr.vmem [resolvable:$true] %s272
      %s274 = sshll.u32 %s10, 4
      %s275 = int_to_ptr.hbm [resolvable:$true] %s274
      %277 = dma.vmem_to_hbm [thread:$0]  %s273, 16, %s275, [#allocation4]
    $region45: #{tpu_custom_call.1} parent=1 // pred_fallthru
      _
    // Predicated region
    $region46: #{tpu_custom_call.1} parent=1 // pred_check
      _
    $region47: #{tpu_custom_call.1} parent=1 // pred_check_branch
      %279 = sbr.rel (0) target = $region49
    $region48: #{tpu_custom_call.1} parent=1 // pred_region
      %281 = dma.done [#allocation4], 16
    $region49: #{tpu_custom_call.1} parent=1 // pred_fallthru
      _
    %282 = vsyncpa [#allocation4], 1

</llo_original>
